<compile_context>
chip_gen: v7x
topology: tpu7x:2x2x1
jax: 0.10.0
libtpu: 0.0.40
codegen_flags: <defaults>
</compile_context>

<pallas_src>
import math

import jax
import jax.numpy as jnp
from jax.experimental import pallas as pl
from jax.experimental.pallas import tpu as pltpu

_LANES = 128        # lane-dense output width (full vreg lane dimension)
_TILE_ROWS = 512    # rows per output tile: 512*128*4B = 256 KiB (x2 buffers)


def _single_variance_kernel(var_ref, out_ref):
    # var_ref: (1, 1) scalar parameter in SMEM
    # out_ref: (tile_rows, 128) lane-dense output tile in VMEM
    s = jnp.exp(var_ref[0, 0] * 10.0)          # one scalar EUP exp per tile
    out_ref[...] = jnp.full(out_ref.shape, s, dtype=out_ref.dtype)


def single_variance_forward(x, variance):
    """x: [N, ...] array (only its leading dim is used). variance: scalar f32.

    Returns [N, 1] float32 == ones([N, 1]) * exp(variance * 10.0).
    """
    n = x.shape[0]
    var2d = jnp.asarray(variance, jnp.float32).reshape(1, 1)

    # Lane-dense slab: enough full 128-wide rows to cover N elements.
    rows = max(1, -(-n // _LANES))             # ceil(n / 128), at least 1
    if rows <= _TILE_ROWS:
        # Single block == full array dims -> (8,128) tiling constraint waived.
        tile_rows = rows
        rows_pad = rows
    else:
        tile_rows = _TILE_ROWS                 # multiple of 8 -> legal block
        rows_pad = math.ceil(rows / _TILE_ROWS) * _TILE_ROWS
    grid = (rows_pad // tile_rows,)

    slab = pl.pallas_call(
        _single_variance_kernel,
        out_shape=jax.ShapeDtypeStruct((rows_pad, _LANES), jnp.float32),
        grid_spec=pltpu.PrefetchScalarGridSpec(
            num_scalar_prefetch=0,
            grid=grid,
            in_specs=[
                pl.BlockSpec((1, 1), lambda i: (0, 0),
                             memory_space=pltpu.MemorySpace.SMEM),
            ],
            out_specs=pl.BlockSpec((tile_rows, _LANES), lambda i: (i, 0)),
        ),
        compiler_params=pltpu.CompilerParams(
            dimension_semantics=("parallel",)),
    )(var2d)

    # Layout plumbing only: slice the constant slab back to the [N, 1] shape.
    return slab.reshape(-1)[:n].reshape(n, 1)


if __name__ == "__main__":
    key = jax.random.PRNGKey(0)

    # Deterministic parameter init (mirrors SingleVarianceNetwork(init_val=0.3)).
    init_val = 0.3
    variance = jnp.float32(init_val)

    ok = True

    # Small shape consistent with typical usage: a batch of 3-D points.
    N, D = 8, 3
    x = jax.random.normal(key, (N, D), dtype=jnp.float32)
    out = jax.block_until_ready(single_variance_forward(x, variance))
    ref = jnp.ones((N, 1), jnp.float32) * jnp.exp(variance * 10.0)
    ok &= (out.shape == (N, 1)) and bool(
        jnp.allclose(out, ref, rtol=1e-6, atol=1e-6))

    # Second small case exercising the slab-slice path (N not a multiple of 128).
    N2 = 300
    x2 = jax.random.normal(key, (N2, D), dtype=jnp.float32)
    out2 = jax.block_until_ready(single_variance_forward(x2, variance))
    ref2 = jnp.ones((N2, 1), jnp.float32) * jnp.exp(variance * 10.0)
    ok &= (out2.shape == (N2, 1)) and bool(
        jnp.allclose(out2, ref2, rtol=1e-6, atol=1e-6))

    assert ok
    print("KERNEL_OK")
</pallas_src>

<mosaic_0001>
module attributes {stable_mosaic.version = 11 : i64} {
  func.func @_single_variance_kernel(%arg0: i32, %arg1: memref<1x1xf32, #tpu.memory_space<smem>>, %arg2: memref<1x128xf32, #tpu.memory_space<vmem>>) attributes {dimension_semantics = [#tpu.dimension_semantics<parallel>], iteration_bounds = array<i64: 1>, scalar_prefetch = 0 : i64, scratch_operands = 0 : i64, tpu.core_type = #tpu.core_type<tc>, window_params = [{transform_indices = @transform_0, window_bounds = array<i64: 1, 1>}, {transform_indices = @transform_1, window_bounds = array<i64: 1, 128>}]} {
    %c0 = arith.constant 0 : index
    %c0_0 = arith.constant 0 : index
    %0 = memref.load %arg1[%c0, %c0_0] : memref<1x1xf32, #tpu.memory_space<smem>>
    %cst = arith.constant 1.000000e+01 : f32
    %1 = arith.mulf %0, %cst : f32
    %2 = math.exp %1 : f32
    %3 = vector.broadcast %2 : f32 to vector<1x128xf32>
    %c0_1 = arith.constant 0 : index
    %c0_2 = arith.constant 0 : index
    %4 = vector.load %arg2[%c0_1, %c0_2] : memref<1x128xf32, #tpu.memory_space<vmem>>, vector<1x128xf32>
    tpu.vector_store %arg2[%c0_1, %c0_2], %3 {strides = array<i32>} : memref<1x128xf32, #tpu.memory_space<vmem>>, vector<1x128xf32>,
    return
  }
  func.func @transform_0(%arg0: i32) -> (i32, i32) {
    %c0_i32 = arith.constant 0 : i32
    %c0_i32_0 = arith.constant 0 : i32
    %c0_i32_1 = arith.constant 0 : i32
    return %c0_i32, %c0_i32_0 : i32, i32
  }
  func.func @transform_1(%arg0: i32) -> (i32, i32) {
    %c0_i32 = arith.constant 0 : i32
    %c0_i32_0 = arith.constant 0 : i32
    return %arg0, %c0_i32 : i32, i32
  }
}

</mosaic_0001>

<llo_original>
// kernel: tpu_custom_call.1
$region0: #{tpu_custom_call.1}
  #allocation0 [shape = 'u32[]', space=smem, size = 0x4, offset = 0x4, fixed_abs, tag = 'smem constant byte address 0x4 - core index']
  #allocation1 [shape = 'u32[144,128]{1,0:T(1,128)}', space=vmem, size = 0x12000, scoped, tag = 'internal scratch']
  #allocation2 [shape = 'f32[1,1]{1,0:T(1,128)S(6)}', space=smem, size = 0x200, scoped, tag = 'scoped memory for tpu_custom_call.1']
  %s0 = inlined_call_operand.<no memory space> [shape: f32[1,1], index: 0, kind: input, shape index: {}]
  %s1 = inlined_call_operand.hbm [shape: f32[1,128], index: 1, kind: output, shape index: {}]
  %s2 = sld [smem:[#allocation0]]
  $region14: #{tpu_custom_call.1} parent=0
    _
  %s4 = ssub.s32 1, %s2
  %s5 = scalar_select 0, %s4, %s2
  %6 = sst [smem:[#allocation2]] %s0
  $region1: #{tpu_custom_call.1} parent=0
    #allocation3 [shape = 'u8[512]{0}', space=vmem, size = 0x400, scoped, tag = 'output window, operand 0, single buffered']
    #allocation4 [shape = 's32[1]{0}', space=sflag, size = 0x4, scoped, tag = 'scoped memory for tpu_custom_call.1']
    %7 = vsyncpa [#allocation4], 0
    // Predicated region
    $region2: #{tpu_custom_call.1} parent=1 // pred_check
      _
    $region3: #{tpu_custom_call.1} parent=1 // pred_check_branch
      %9 = sbr.rel (0) target = $region5
    $region4: #{tpu_custom_call.1} parent=1 // pred_region
      _
    $region5: #{tpu_custom_call.1} parent=1 // pred_fallthru
      _
    %s10 = sld [smem:[#allocation2]]
    %s11 = smul.f32 %s10, 10.0
    %v12 = vstv %s11
    %v13 = vmul.f32 %v12, 1.442695
    %v14 = vpow.pop %v13
    %s15 = vtos %v14
    %v16 = vstv %s15
    %17 = vst [vmem:[#allocation3] sm:$0x1] %v16
    // Predicated region
    $region6: #{tpu_custom_call.1} parent=1 // pred_check
      _
    $region7: #{tpu_custom_call.1} parent=1 // pred_check_branch
      %19 = sbr.rel (0) target = $region9
    $region8: #{tpu_custom_call.1} parent=1 // pred_region
      %s21 = ssub.s32 16, 16
      %22 = vsyncadd [#allocation4], %s21
      %s24 = sshll.u32 [#allocation3], 4
      %s25 = int_to_ptr.vmem [resolvable:$true] %s24
      %27 = dma.vmem_to_hbm [thread:$0]  %s25, 16, %s1, [#allocation4]
    $region9: #{tpu_custom_call.1} parent=1 // pred_fallthru
      _
    // Predicated region
    $region10: #{tpu_custom_call.1} parent=1 // pred_check
      _
    $region11: #{tpu_custom_call.1} parent=1 // pred_check_branch
      %29 = sbr.rel (0) target = $region13
    $region12: #{tpu_custom_call.1} parent=1 // pred_region
      %30 = dma.done [#allocation4], 16
    $region13: #{tpu_custom_call.1} parent=1 // pred_fallthru
      _
    %31 = vsyncpa [#allocation4], 1

</llo_original>
